<compile_context>
chip_gen: v7x
topology: tpu7x:2x2x1
jax: 0.10.0
libtpu: 0.0.40
codegen_flags: <defaults>
</compile_context>

<pallas_src>
import functools

import jax
import jax.numpy as jnp
from jax.experimental import pallas as pl
from jax.experimental.pallas import tpu as pltpu


def _siglip_attn_kernel(x_ref, wqkv_ref, bqkv_ref, wo_ref, bo_ref, *rest,
                        heads_per_step, head_dim, with_attnw, attnw_dtype):
    """One (batch, head-group) grid step: fused QKV projection for the group,
    per-head softmax(QK^T)V, and the group's partial out-projection accumulated
    over the head-group grid axis."""
    if with_attnw:
        out_ref, attnw_ref, acc_ref = rest
    else:
        out_ref, acc_ref = rest
        attnw_ref = None

    g = pl.program_id(1)

    @pl.when(g == 0)
    def _init():
        acc_ref[...] = jnp.zeros_like(acc_ref)

    n = heads_per_step * head_dim
    x = x_ref[0]                                           # (S, D) bf16

    # Fused group QKV projection: (S, D) x (D, 3n).  Scale already folded into
    # Wq/bq on the host; bias add in f32, single bf16 cast pass.
    qkv = jnp.dot(x, wqkv_ref[0], preferred_element_type=jnp.float32) + bqkv_ref[0]
    qkv = qkv.astype(jnp.bfloat16)                         # (S, 3n)
    q = qkv[:, 0 * n:1 * n]
    k = qkv[:, 1 * n:2 * n]
    v = qkv[:, 2 * n:3 * n]

    ctx = []
    for i in range(heads_per_step):                        # unrolled, static slices
        lo, hi = i * head_dim, (i + 1) * head_dim
        qi, ki, vi = q[:, lo:hi], k[:, lo:hi], v[:, lo:hi]

        # scores = q @ k^T : contract head_dim of both operands (no transpose).
        s = jax.lax.dot_general(qi, ki, (((1,), (1,)), ((), ())),
                                preferred_element_type=jnp.float32)

        # Softmax over keys in f32.  Reciprocal is exact and only over the
        # (S, 1) denominator column, so exposed attn_weights rows sum to 1.
        m = jnp.max(s, axis=-1, keepdims=True)
        e = jnp.exp(s - m)
        p = e * pl.reciprocal(jnp.sum(e, axis=-1, keepdims=True))

        p_b = p.astype(jnp.bfloat16)                       # single cast, reused
        if attnw_ref is not None:
            if attnw_dtype == jnp.dtype(jnp.bfloat16):
                attnw_ref[0, i] = p_b
            else:
                attnw_ref[0, i] = p.astype(attnw_dtype)

        ctx.append(jnp.dot(p_b, vi, preferred_element_type=jnp.float32))  # (S, hd)

    # Concatenate the group's head contexts -> out-projection with K = hg*hd,
    # accumulated over the head-group axis in f32 VMEM.
    ctx_b = jnp.concatenate(ctx, axis=-1).astype(jnp.bfloat16)            # (S, n)
    acc_ref[...] += jnp.dot(ctx_b, wo_ref[0], preferred_element_type=jnp.float32)

    @pl.when(g == pl.num_programs(1) - 1)
    def _finalize():
        out_ref[0] = (acc_ref[...] + bo_ref[...]).astype(out_ref.dtype)


def _pick_heads_per_step(num_heads, head_dim, lane_target=128):
    """Smallest divisor of num_heads whose group width hg*hd is lane-dense
    (>= 128); fall back to all heads for tiny models."""
    for hg in range(1, num_heads + 1):
        if num_heads % hg == 0 and hg * head_dim >= lane_target:
            return hg
    return num_heads


def siglip_attention(hidden_states, params, *, num_heads, heads_per_step=None,
                     return_attn_weights=True, attn_weights_dtype=None):
    """hidden_states: (B, S, D). params: PyTorch-layout (out,in) weights / biases."""
    B, S, D = hidden_states.shape
    assert D % num_heads == 0
    hd = D // num_heads
    scale = hd ** (-0.5)
    out_dtype = hidden_states.dtype
    attnw_dtype = jnp.dtype(attn_weights_dtype if attn_weights_dtype is not None
                            else out_dtype)

    hg = heads_per_step if heads_per_step is not None else _pick_heads_per_step(num_heads, hd)
    assert num_heads % hg == 0
    G = num_heads // hg
    n = hg * hd

    # ---- host-side packing (once): transpose, fold scale, group heads, bf16 ----
    def group_cols(w_t):             # W^T (D_in, D_out), head-major cols -> (G, D, n)
        return w_t.reshape(D, G, n).transpose(1, 0, 2)

    wq_t = params["wq"].T * scale                       # fold softmax scale into Wq
    wk_t = params["wk"].T
    wv_t = params["wv"].T
    wqkv = jnp.concatenate(
        [group_cols(wq_t), group_cols(wk_t), group_cols(wv_t)],
        axis=-1).astype(jnp.bfloat16)                                   # (G, D, 3n)
    bqkv = jnp.concatenate(
        [(params["bq"] * scale).reshape(G, n),
         params["bk"].reshape(G, n),
         params["bv"].reshape(G, n)],
        axis=-1).reshape(G, 1, 3 * n).astype(jnp.float32)               # (G, 1, 3n)
    wo_g = params["wo"].T.reshape(G, n, D).astype(jnp.bfloat16)         # (G, n, D)
    bo = params["bo"].reshape(1, D).astype(jnp.float32)                 # (1, D)
    x_b = hidden_states.astype(jnp.bfloat16)

    kernel = functools.partial(
        _siglip_attn_kernel, heads_per_step=hg, head_dim=hd,
        with_attnw=return_attn_weights, attnw_dtype=attnw_dtype)

    out_shapes = [jax.ShapeDtypeStruct((B, S, D), out_dtype)]
    out_specs = [pl.BlockSpec((1, S, D), lambda b, g: (b, 0, 0))]       # resident over g
    if return_attn_weights:
        out_shapes.append(jax.ShapeDtypeStruct((B, num_heads, S, S), attnw_dtype))
        out_specs.append(pl.BlockSpec((1, hg, S, S), lambda b, g: (b, g, 0, 0)))

    attnw_bytes = (B * num_heads * S * S * attnw_dtype.itemsize
                   if return_attn_weights else 0)
    cost = pl.CostEstimate(
        flops=int(B * (8 * S * D * D + 4 * num_heads * S * S * hd)),
        transcendentals=int(B * num_heads * S * S),
        bytes_accessed=int(x_b.size * 2 + B * S * D * jnp.dtype(out_dtype).itemsize
                           + attnw_bytes + B * (wqkv.size + wo_g.size) * 2
                           + B * (bqkv.size + bo.size) * 4),
    )

    result = pl.pallas_call(
        kernel,
        out_shape=tuple(out_shapes),
        grid_spec=pltpu.PrefetchScalarGridSpec(
            num_scalar_prefetch=0,
            grid=(B, G),
            in_specs=[
                pl.BlockSpec((1, S, D), lambda b, g: (b, 0, 0)),        # x (bf16)
                pl.BlockSpec((1, D, 3 * n), lambda b, g: (g, 0, 0)),    # group Wq|Wk|Wv^T
                pl.BlockSpec((1, 1, 3 * n), lambda b, g: (g, 0, 0)),    # group biases
                pl.BlockSpec((1, n, D), lambda b, g: (g, 0, 0)),        # group Wo^T rows
                pl.BlockSpec((1, D), lambda b, g: (0, 0)),              # bo (grid-invariant)
            ],
            out_specs=out_specs,
            scratch_shapes=[pltpu.VMEM((S, D), jnp.float32)],           # f32 out accumulator
        ),
        compiler_params=pltpu.CompilerParams(
            dimension_semantics=("parallel", "arbitrary"),
            vmem_limit_bytes=32 * 1024 * 1024),
        cost_estimate=cost,
    )(x_b, wqkv, bqkv, wo_g, bo)

    if return_attn_weights:
        out, attnw = result
        return out, attnw
    out = result[0] if isinstance(result, (tuple, list)) else result
    return out, None


def _reference(hidden_states, params, *, num_heads):
    """Pure-JAX f32 reference mirroring the PyTorch forward."""
    B, S, D = hidden_states.shape
    hd = D // num_heads
    scale = hd ** (-0.5)

    def lin(x, w, b):
        return x @ w.T + b

    q = lin(hidden_states, params["wq"], params["bq"]).reshape(B, S, num_heads, hd).transpose(0, 2, 1, 3)
    k = lin(hidden_states, params["wk"], params["bk"]).reshape(B, S, num_heads, hd).transpose(0, 2, 1, 3)
    v = lin(hidden_states, params["wv"], params["bv"]).reshape(B, S, num_heads, hd).transpose(0, 2, 1, 3)
    s = jnp.einsum('bhqd,bhkd->bhqk', q, k) * scale
    p = jax.nn.softmax(s.astype(jnp.float32), axis=-1).astype(q.dtype)
    o = jnp.einsum('bhqk,bhkd->bhqd', p, v).transpose(0, 2, 1, 3).reshape(B, S, D)
    return lin(o, params["wo"], params["bo"]), p


if __name__ == "__main__":
    # Small config consistent with the module: hidden=32, heads=4, seq=8, batch=2
    B, S, D, H = 2, 8, 32, 4

    key = jax.random.PRNGKey(0)
    ks = jax.random.split(key, 9)
    init = lambda k, shape: (jax.random.normal(k, shape, jnp.float32) * 0.05)
    params = {
        "wq": init(ks[0], (D, D)), "bq": init(ks[1], (D,)),
        "wk": init(ks[2], (D, D)), "bk": init(ks[3], (D,)),
        "wv": init(ks[4], (D, D)), "bv": init(ks[5], (D,)),
        "wo": init(ks[6], (D, D)), "bo": init(ks[7], (D,)),
    }
    x = jax.random.normal(ks[8], (B, S, D), jnp.float32)

    ref_out, ref_attnw = _reference(x, params, num_heads=H)

    # Variant 1: full module semantics (attn_weights returned in hidden dtype).
    out, attnw = siglip_attention(x, params, num_heads=H)
    jax.block_until_ready((out, attnw))
    assert out.shape == (B, S, D) and attnw.shape == (B, H, S, S)
    # Tolerances account for bf16 MXU operands in the kernel (reference is f32).
    assert jnp.allclose(out, ref_out, atol=1e-2, rtol=1e-2), \
        f"out mismatch: max abs diff {float(jnp.max(jnp.abs(out - ref_out)))}"
    assert jnp.allclose(attnw, ref_attnw, atol=1e-2, rtol=1e-2), \
        f"attnw mismatch: max abs diff {float(jnp.max(jnp.abs(attnw - ref_attnw)))}"

    # Variant 2: attn_weights writeback skipped (the big HBM saving at real sizes).
    out2, none_w = siglip_attention(x, params, num_heads=H, return_attn_weights=False)
    jax.block_until_ready(out2)
    assert none_w is None
    assert jnp.allclose(out2, ref_out, atol=1e-2, rtol=1e-2), \
        f"out (no-attnw) mismatch: max abs diff {float(jnp.max(jnp.abs(out2 - ref_out)))}"

    print("KERNEL_OK")
</pallas_src>

<mosaic_0001>
module attributes {stable_mosaic.version = 11 : i64} {
  func.func @_siglip_attn_kernel(%arg0: i32, %arg1: i32, %arg2: memref<1x8x32xbf16, #tpu.memory_space<vmem>>, %arg3: memref<1x32x96xbf16, #tpu.memory_space<vmem>>, %arg4: memref<1x1x96xf32, #tpu.memory_space<vmem>>, %arg5: memref<1x32x32xbf16, #tpu.memory_space<vmem>>, %arg6: memref<1x32xf32, #tpu.memory_space<vmem>>, %arg7: memref<1x8x32xf32, #tpu.memory_space<vmem>>, %arg8: memref<1x4x8x8xf32, #tpu.memory_space<vmem>>, %arg9: memref<8x32xf32, #tpu.memory_space<vmem>>) attributes {dimension_semantics = [#tpu.dimension_semantics<parallel>, #tpu.dimension_semantics<arbitrary>], iteration_bounds = array<i64: 2, 1>, scalar_prefetch = 0 : i64, scratch_operands = 1 : i64, tpu.core_type = #tpu.core_type<tc>, window_params = [{transform_indices = @transform_0, window_bounds = array<i64: 1, 8, 32>}, {transform_indices = @transform_1, window_bounds = array<i64: 1, 32, 96>}, {transform_indices = @transform_2, window_bounds = array<i64: 1, 1, 96>}, {transform_indices = @transform_3, window_bounds = array<i64: 1, 32, 32>}, {pipeline_mode = #tpu.pipeline_mode<synchronous>, transform_indices = @transform_4, window_bounds = array<i64: 1, 32>}, {transform_indices = @transform_5, window_bounds = array<i64: 1, 8, 32>}, {transform_indices = @transform_6, window_bounds = array<i64: 1, 4, 8, 8>}]} {
    %c0_i32 = arith.constant 0 : i32
    %0 = arith.cmpi eq, %arg1, %c0_i32 : i32
    %1 = arith.extui %0 : i1 to i32
    %c0_i32_0 = arith.constant 0 : i32
    %2 = arith.cmpi ne, %1, %c0_i32_0 : i32
    scf.if %2 {
      %cst_48 = arith.constant 0.000000e+00 : f32
      %103 = vector.broadcast %cst_48 : f32 to vector<8x32xf32>
      %c0_49 = arith.constant 0 : index
      %c0_50 = arith.constant 0 : index
      %104 = vector.load %arg9[%c0_49, %c0_50] : memref<8x32xf32, #tpu.memory_space<vmem>>, vector<8x32xf32>
      tpu.vector_store %arg9[%c0_49, %c0_50], %103 {strides = array<i32>} : memref<8x32xf32, #tpu.memory_space<vmem>>, vector<8x32xf32>,
    } else {
    }
    %c0 = arith.constant 0 : index
    %c0_1 = arith.constant 0 : index
    %c0_2 = arith.constant 0 : index
    %3 = vector.load %arg2[%c0, %c0_1, %c0_2] : memref<1x8x32xbf16, #tpu.memory_space<vmem>>, vector<1x8x32xbf16>
    %4 = vector.shape_cast %3 : vector<1x8x32xbf16> to vector<8x32xbf16>
    %c0_3 = arith.constant 0 : index
    %c0_4 = arith.constant 0 : index
    %c0_5 = arith.constant 0 : index
    %5 = vector.load %arg3[%c0_3, %c0_4, %c0_5] : memref<1x32x96xbf16, #tpu.memory_space<vmem>>, vector<1x32x96xbf16>
    %6 = vector.shape_cast %5 : vector<1x32x96xbf16> to vector<32x96xbf16>
    %cst = arith.constant dense<0.000000e+00> : vector<8x96xf32>
    %7 = tpu.matmul %4, %6, %cst {dimension_numbers = #tpu.dot_dimension_numbers<[1], [0], [0], [1], [0, 0, 1, 1], [], []>} : vector<8x32xbf16>, vector<32x96xbf16>, vector<8x96xf32> -> vector<8x96xf32>
    %c0_6 = arith.constant 0 : index
    %c0_7 = arith.constant 0 : index
    %c0_8 = arith.constant 0 : index
    %8 = vector.load %arg4[%c0_6, %c0_7, %c0_8] : memref<1x1x96xf32, #tpu.memory_space<vmem>>, vector<1x1x96xf32>
    %9 = vector.shape_cast %8 : vector<1x1x96xf32> to vector<1x96xf32>
    %10 = vector.broadcast %9 : vector<1x96xf32> to vector<8x96xf32>
    %11 = arith.addf %7, %10 : vector<8x96xf32>
    %12 = arith.truncf %11 : vector<8x96xf32> to vector<8x96xbf16>
    %13 = vector.extract_strided_slice %12 {offsets = [0, 0], sizes = [8, 32], strides = [1, 1]} : vector<8x96xbf16> to vector<8x32xbf16>
    %14 = vector.extract_strided_slice %12 {offsets = [0, 32], sizes = [8, 32], strides = [1, 1]} : vector<8x96xbf16> to vector<8x32xbf16>
    %15 = vector.extract_strided_slice %12 {offsets = [0, 64], sizes = [8, 32], strides = [1, 1]} : vector<8x96xbf16> to vector<8x32xbf16>
    %16 = vector.extract_strided_slice %13 {offsets = [0, 0], sizes = [8, 8], strides = [1, 1]} : vector<8x32xbf16> to vector<8x8xbf16>
    %17 = vector.extract_strided_slice %14 {offsets = [0, 0], sizes = [8, 8], strides = [1, 1]} : vector<8x32xbf16> to vector<8x8xbf16>
    %18 = vector.extract_strided_slice %15 {offsets = [0, 0], sizes = [8, 8], strides = [1, 1]} : vector<8x32xbf16> to vector<8x8xbf16>
    %cst_9 = arith.constant dense<0.000000e+00> : vector<8x8xf32>
    %19 = tpu.matmul %16, %17, %cst_9 {dimension_numbers = #tpu.dot_dimension_numbers<[1], [1], [0], [0], [0, 0, 1, 0], [], []>} : vector<8x8xbf16>, vector<8x8xbf16>, vector<8x8xf32> -> vector<8x8xf32>
    %cst_10 = arith.constant dense<0xFF800000> : vector<8xf32>
    %20 = vector.multi_reduction <maximumf>, %19, %cst_10 [1] : vector<8x8xf32> to vector<8xf32>
    %21 = vector.shape_cast %20 : vector<8xf32> to vector<8x1xf32>
    %22 = vector.broadcast %21 : vector<8x1xf32> to vector<8x8xf32>
    %23 = arith.subf %19, %22 : vector<8x8xf32>
    %24 = math.exp %23 : vector<8x8xf32>
    %cst_11 = arith.constant dense<0.000000e+00> : vector<8xf32>
    %25 = vector.multi_reduction <add>, %24, %cst_11 [1] : vector<8x8xf32> to vector<8xf32>
    %26 = vector.shape_cast %25 : vector<8xf32> to vector<8x1xf32>
    %27 = tpu.reciprocal %26 : vector<8x1xf32> -> vector<8x1xf32>
    %28 = vector.broadcast %27 : vector<8x1xf32> to vector<8x8xf32>
    %29 = arith.mulf %24, %28 : vector<8x8xf32>
    %30 = arith.truncf %29 : vector<8x8xf32> to vector<8x8xbf16>
    %c0_12 = arith.constant 0 : index
    %c0_13 = arith.constant 0 : index
    %c0_14 = arith.constant 0 : index
    %c0_15 = arith.constant 0 : index
    %31 = vector.load %arg8[%c0_12, %c0_13, %c0_14, %c0_15] : memref<1x4x8x8xf32, #tpu.memory_space<vmem>>, vector<1x1x8x8xf32>
    %32 = vector.shape_cast %31 : vector<1x1x8x8xf32> to vector<8x8xf32>
    %33 = vector.shape_cast %29 : vector<8x8xf32> to vector<1x1x8x8xf32>
    tpu.vector_store %arg8[%c0_12, %c0_13, %c0_14, %c0_15], %33 {strides = array<i32>} : memref<1x4x8x8xf32, #tpu.memory_space<vmem>>, vector<1x1x8x8xf32>,
    %cst_16 = arith.constant dense<0.000000e+00> : vector<8x8xf32>
    %34 = tpu.matmul %30, %18, %cst_16 {dimension_numbers = #tpu.dot_dimension_numbers<[1], [0], [0], [1], [0, 0, 1, 1], [], []>} : vector<8x8xbf16>, vector<8x8xbf16>, vector<8x8xf32> -> vector<8x8xf32>
    %35 = vector.extract_strided_slice %13 {offsets = [0, 8], sizes = [8, 8], strides = [1, 1]} : vector<8x32xbf16> to vector<8x8xbf16>
    %36 = vector.extract_strided_slice %14 {offsets = [0, 8], sizes = [8, 8], strides = [1, 1]} : vector<8x32xbf16> to vector<8x8xbf16>
    %37 = vector.extract_strided_slice %15 {offsets = [0, 8], sizes = [8, 8], strides = [1, 1]} : vector<8x32xbf16> to vector<8x8xbf16>
    %cst_17 = arith.constant dense<0.000000e+00> : vector<8x8xf32>
    %38 = tpu.matmul %35, %36, %cst_17 {dimension_numbers = #tpu.dot_dimension_numbers<[1], [1], [0], [0], [0, 0, 1, 0], [], []>} : vector<8x8xbf16>, vector<8x8xbf16>, vector<8x8xf32> -> vector<8x8xf32>
    %cst_18 = arith.constant dense<0xFF800000> : vector<8xf32>
    %39 = vector.multi_reduction <maximumf>, %38, %cst_18 [1] : vector<8x8xf32> to vector<8xf32>
    %40 = vector.shape_cast %39 : vector<8xf32> to vector<8x1xf32>
    %41 = vector.broadcast %40 : vector<8x1xf32> to vector<8x8xf32>
    %42 = arith.subf %38, %41 : vector<8x8xf32>
    %43 = math.exp %42 : vector<8x8xf32>
    %cst_19 = arith.constant dense<0.000000e+00> : vector<8xf32>
    %44 = vector.multi_reduction <add>, %43, %cst_19 [1] : vector<8x8xf32> to vector<8xf32>
    %45 = vector.shape_cast %44 : vector<8xf32> to vector<8x1xf32>
    %46 = tpu.reciprocal %45 : vector<8x1xf32> -> vector<8x1xf32>
    %47 = vector.broadcast %46 : vector<8x1xf32> to vector<8x8xf32>
    %48 = arith.mulf %43, %47 : vector<8x8xf32>
    %49 = arith.truncf %48 : vector<8x8xf32> to vector<8x8xbf16>
    %c0_20 = arith.constant 0 : index
    %c1 = arith.constant 1 : index
    %c0_21 = arith.constant 0 : index
    %c0_22 = arith.constant 0 : index
    %50 = vector.load %arg8[%c0_20, %c1, %c0_21, %c0_22] : memref<1x4x8x8xf32, #tpu.memory_space<vmem>>, vector<1x1x8x8xf32>
    %51 = vector.shape_cast %50 : vector<1x1x8x8xf32> to vector<8x8xf32>
    %52 = vector.shape_cast %48 : vector<8x8xf32> to vector<1x1x8x8xf32>
    tpu.vector_store %arg8[%c0_20, %c1, %c0_21, %c0_22], %52 {strides = array<i32>} : memref<1x4x8x8xf32, #tpu.memory_space<vmem>>, vector<1x1x8x8xf32>,
    %cst_23 = arith.constant dense<0.000000e+00> : vector<8x8xf32>
    %53 = tpu.matmul %49, %37, %cst_23 {dimension_numbers = #tpu.dot_dimension_numbers<[1], [0], [0], [1], [0, 0, 1, 1], [], []>} : vector<8x8xbf16>, vector<8x8xbf16>, vector<8x8xf32> -> vector<8x8xf32>
    %54 = vector.extract_strided_slice %13 {offsets = [0, 16], sizes = [8, 8], strides = [1, 1]} : vector<8x32xbf16> to vector<8x8xbf16>
    %55 = vector.extract_strided_slice %14 {offsets = [0, 16], sizes = [8, 8], strides = [1, 1]} : vector<8x32xbf16> to vector<8x8xbf16>
    %56 = vector.extract_strided_slice %15 {offsets = [0, 16], sizes = [8, 8], strides = [1, 1]} : vector<8x32xbf16> to vector<8x8xbf16>
    %cst_24 = arith.constant dense<0.000000e+00> : vector<8x8xf32>
    %57 = tpu.matmul %54, %55, %cst_24 {dimension_numbers = #tpu.dot_dimension_numbers<[1], [1], [0], [0], [0, 0, 1, 0], [], []>} : vector<8x8xbf16>, vector<8x8xbf16>, vector<8x8xf32> -> vector<8x8xf32>
    %cst_25 = arith.constant dense<0xFF800000> : vector<8xf32>
    %58 = vector.multi_reduction <maximumf>, %57, %cst_25 [1] : vector<8x8xf32> to vector<8xf32>
    %59 = vector.shape_cast %58 : vector<8xf32> to vector<8x1xf32>
    %60 = vector.broadcast %59 : vector<8x1xf32> to vector<8x8xf32>
    %61 = arith.subf %57, %60 : vector<8x8xf32>
    %62 = math.exp %61 : vector<8x8xf32>
    %cst_26 = arith.constant dense<0.000000e+00> : vector<8xf32>
    %63 = vector.multi_reduction <add>, %62, %cst_26 [1] : vector<8x8xf32> to vector<8xf32>
    %64 = vector.shape_cast %63 : vector<8xf32> to vector<8x1xf32>
    %65 = tpu.reciprocal %64 : vector<8x1xf32> -> vector<8x1xf32>
    %66 = vector.broadcast %65 : vector<8x1xf32> to vector<8x8xf32>
    %67 = arith.mulf %62, %66 : vector<8x8xf32>
    %68 = arith.truncf %67 : vector<8x8xf32> to vector<8x8xbf16>
    %c0_27 = arith.constant 0 : index
    %c2 = arith.constant 2 : index
    %c0_28 = arith.constant 0 : index
    %c0_29 = arith.constant 0 : index
    %69 = vector.load %arg8[%c0_27, %c2, %c0_28, %c0_29] : memref<1x4x8x8xf32, #tpu.memory_space<vmem>>, vector<1x1x8x8xf32>
    %70 = vector.shape_cast %69 : vector<1x1x8x8xf32> to vector<8x8xf32>
    %71 = vector.shape_cast %67 : vector<8x8xf32> to vector<1x1x8x8xf32>
    tpu.vector_store %arg8[%c0_27, %c2, %c0_28, %c0_29], %71 {strides = array<i32>} : memref<1x4x8x8xf32, #tpu.memory_space<vmem>>, vector<1x1x8x8xf32>,
    %cst_30 = arith.constant dense<0.000000e+00> : vector<8x8xf32>
    %72 = tpu.matmul %68, %56, %cst_30 {dimension_numbers = #tpu.dot_dimension_numbers<[1], [0], [0], [1], [0, 0, 1, 1], [], []>} : vector<8x8xbf16>, vector<8x8xbf16>, vector<8x8xf32> -> vector<8x8xf32>
    %73 = vector.extract_strided_slice %13 {offsets = [0, 24], sizes = [8, 8], strides = [1, 1]} : vector<8x32xbf16> to vector<8x8xbf16>
    %74 = vector.extract_strided_slice %14 {offsets = [0, 24], sizes = [8, 8], strides = [1, 1]} : vector<8x32xbf16> to vector<8x8xbf16>
    %75 = vector.extract_strided_slice %15 {offsets = [0, 24], sizes = [8, 8], strides = [1, 1]} : vector<8x32xbf16> to vector<8x8xbf16>
    %cst_31 = arith.constant dense<0.000000e+00> : vector<8x8xf32>
    %76 = tpu.matmul %73, %74, %cst_31 {dimension_numbers = #tpu.dot_dimension_numbers<[1], [1], [0], [0], [0, 0, 1, 0], [], []>} : vector<8x8xbf16>, vector<8x8xbf16>, vector<8x8xf32> -> vector<8x8xf32>
    %cst_32 = arith.constant dense<0xFF800000> : vector<8xf32>
    %77 = vector.multi_reduction <maximumf>, %76, %cst_32 [1] : vector<8x8xf32> to vector<8xf32>
    %78 = vector.shape_cast %77 : vector<8xf32> to vector<8x1xf32>
    %79 = vector.broadcast %78 : vector<8x1xf32> to vector<8x8xf32>
    %80 = arith.subf %76, %79 : vector<8x8xf32>
    %81 = math.exp %80 : vector<8x8xf32>
    %cst_33 = arith.constant dense<0.000000e+00> : vector<8xf32>
    %82 = vector.multi_reduction <add>, %81, %cst_33 [1] : vector<8x8xf32> to vector<8xf32>
    %83 = vector.shape_cast %82 : vector<8xf32> to vector<8x1xf32>
    %84 = tpu.reciprocal %83 : vector<8x1xf32> -> vector<8x1xf32>
    %85 = vector.broadcast %84 : vector<8x1xf32> to vector<8x8xf32>
    %86 = arith.mulf %81, %85 : vector<8x8xf32>
    %87 = arith.truncf %86 : vector<8x8xf32> to vector<8x8xbf16>
    %c0_34 = arith.constant 0 : index
    %c3 = arith.constant 3 : index
    %c0_35 = arith.constant 0 : index
    %c0_36 = arith.constant 0 : index
    %88 = vector.load %arg8[%c0_34, %c3, %c0_35, %c0_36] : memref<1x4x8x8xf32, #tpu.memory_space<vmem>>, vector<1x1x8x8xf32>
    %89 = vector.shape_cast %88 : vector<1x1x8x8xf32> to vector<8x8xf32>
    %90 = vector.shape_cast %86 : vector<8x8xf32> to vector<1x1x8x8xf32>
    tpu.vector_store %arg8[%c0_34, %c3, %c0_35, %c0_36], %90 {strides = array<i32>} : memref<1x4x8x8xf32, #tpu.memory_space<vmem>>, vector<1x1x8x8xf32>,
    %cst_37 = arith.constant dense<0.000000e+00> : vector<8x8xf32>
    %91 = tpu.matmul %87, %75, %cst_37 {dimension_numbers = #tpu.dot_dimension_numbers<[1], [0], [0], [1], [0, 0, 1, 1], [], []>} : vector<8x8xbf16>, vector<8x8xbf16>, vector<8x8xf32> -> vector<8x8xf32>
    %92 = tpu.concatenate %34, %53, %72, %91 in 1 : vector<8x8xf32>, vector<8x8xf32>, vector<8x8xf32>, vector<8x8xf32> -> vector<8x32xf32>
    %93 = arith.truncf %92 : vector<8x32xf32> to vector<8x32xbf16>
    %c0_38 = arith.constant 0 : index
    %c0_39 = arith.constant 0 : index
    %94 = vector.load %arg9[%c0_38, %c0_39] : memref<8x32xf32, #tpu.memory_space<vmem>>, vector<8x32xf32>
    %c0_40 = arith.constant 0 : index
    %c0_41 = arith.constant 0 : index
    %c0_42 = arith.constant 0 : index
    %95 = vector.load %arg5[%c0_40, %c0_41, %c0_42] : memref<1x32x32xbf16, #tpu.memory_space<vmem>>, vector<1x32x32xbf16>
    %96 = vector.shape_cast %95 : vector<1x32x32xbf16> to vector<32x32xbf16>
    %cst_43 = arith.constant dense<0.000000e+00> : vector<8x32xf32>
    %97 = tpu.matmul %93, %96, %cst_43 {dimension_numbers = #tpu.dot_dimension_numbers<[1], [0], [0], [1], [0, 0, 1, 1], [], []>} : vector<8x32xbf16>, vector<32x32xbf16>, vector<8x32xf32> -> vector<8x32xf32>
    %98 = arith.addf %94, %97 : vector<8x32xf32>
    %c0_44 = arith.constant 0 : index
    %c0_45 = arith.constant 0 : index
    %99 = vector.load %arg9[%c0_44, %c0_45] : memref<8x32xf32, #tpu.memory_space<vmem>>, vector<8x32xf32>
    tpu.vector_store %arg9[%c0_44, %c0_45], %98 {strides = array<i32>} : memref<8x32xf32, #tpu.memory_space<vmem>>, vector<8x32xf32>,
    %c0_i32_46 = arith.constant 0 : i32
    %100 = arith.cmpi eq, %arg1, %c0_i32_46 : i32
    %101 = arith.extui %100 : i1 to i32
    %c0_i32_47 = arith.constant 0 : i32
    %102 = arith.cmpi ne, %101, %c0_i32_47 : i32
    scf.if %102 {
      %c0_48 = arith.constant 0 : index
      %c0_49 = arith.constant 0 : index
      %103 = vector.load %arg9[%c0_48, %c0_49] : memref<8x32xf32, #tpu.memory_space<vmem>>, vector<8x32xf32>
      %c0_50 = arith.constant 0 : index
      %c0_51 = arith.constant 0 : index
      %104 = vector.load %arg6[%c0_50, %c0_51] : memref<1x32xf32, #tpu.memory_space<vmem>>, vector<1x32xf32>
      %105 = vector.broadcast %104 : vector<1x32xf32> to vector<8x32xf32>
      %106 = arith.addf %103, %105 : vector<8x32xf32>
      %c0_52 = arith.constant 0 : index
      %c0_53 = arith.constant 0 : index
      %c0_54 = arith.constant 0 : index
      %107 = vector.load %arg7[%c0_52, %c0_53, %c0_54] : memref<1x8x32xf32, #tpu.memory_space<vmem>>, vector<1x8x32xf32>
      %108 = vector.shape_cast %107 : vector<1x8x32xf32> to vector<8x32xf32>
      %109 = vector.shape_cast %106 : vector<8x32xf32> to vector<1x8x32xf32>
      tpu.vector_store %arg7[%c0_52, %c0_53, %c0_54], %109 {strides = array<i32>} : memref<1x8x32xf32, #tpu.memory_space<vmem>>, vector<1x8x32xf32>,
    } else {
    }
    return
  }
  func.func @transform_0(%arg0: i32, %arg1: i32) -> (i32, i32, i32) {
    %c0_i32 = arith.constant 0 : i32
    %c0_i32_0 = arith.constant 0 : i32
    %c0_i32_1 = arith.constant 0 : i32
    return %arg0, %c0_i32, %c0_i32_0 : i32, i32, i32
  }
  func.func @transform_1(%arg0: i32, %arg1: i32) -> (i32, i32, i32) {
    %c0_i32 = arith.constant 0 : i32
    %c0_i32_0 = arith.constant 0 : i32
    %c0_i32_1 = arith.constant 0 : i32
    return %arg1, %c0_i32, %c0_i32_0 : i32, i32, i32
  }
  func.func @transform_2(%arg0: i32, %arg1: i32) -> (i32, i32, i32) {
    %c0_i32 = arith.constant 0 : i32
    %c0_i32_0 = arith.constant 0 : i32
    %c0_i32_1 = arith.constant 0 : i32
    return %arg1, %c0_i32, %c0_i32_0 : i32, i32, i32
  }
  func.func @transform_3(%arg0: i32, %arg1: i32) -> (i32, i32, i32) {
    %c0_i32 = arith.constant 0 : i32
    %c0_i32_0 = arith.constant 0 : i32
    %c0_i32_1 = arith.constant 0 : i32
    return %arg1, %c0_i32, %c0_i32_0 : i32, i32, i32
  }
  func.func @transform_4(%arg0: i32, %arg1: i32) -> (i32, i32) {
    %c0_i32 = arith.constant 0 : i32
    %c0_i32_0 = arith.constant 0 : i32
    %c0_i32_1 = arith.constant 0 : i32
    return %c0_i32, %c0_i32_0 : i32, i32
  }
  func.func @transform_5(%arg0: i32, %arg1: i32) -> (i32, i32, i32) {
    %c0_i32 = arith.constant 0 : i32
    %c0_i32_0 = arith.constant 0 : i32
    %c0_i32_1 = arith.constant 0 : i32
    return %arg0, %c0_i32, %c0_i32_0 : i32, i32, i32
  }
  func.func @transform_6(%arg0: i32, %arg1: i32) -> (i32, i32, i32, i32) {
    %c0_i32 = arith.constant 0 : i32
    %c0_i32_0 = arith.constant 0 : i32
    %c0_i32_1 = arith.constant 0 : i32
    return %arg0, %arg1, %c0_i32, %c0_i32_0 : i32, i32, i32, i32
  }
}

</mosaic_0001>

<llo_original>
// kernel: tpu_custom_call.1
$region0: #{tpu_custom_call.1}
  #allocation0 [shape = 'u32[]', space=smem, size = 0x4, offset = 0x4, fixed_abs, tag = 'smem constant byte address 0x4 - core index']
  #allocation1 [shape = 'u32[144,128]{1,0:T(1,128)}', space=vmem, size = 0x12000, scoped, tag = 'internal scratch']
  #allocation2 [shape = 'f32[8,32]{1,0:T(8,128)}', space=vmem, size = 0x1000, scoped, tag = 'scratch operand']
  %s0 = inlined_call_operand.hbm [shape: bf16[2,8,32], index: 0, kind: input, shape index: {}]
  %s1 = inlined_call_operand.hbm [shape: bf16[1,32,96], index: 1, kind: input, shape index: {}]
  %s2 = inlined_call_operand.vmem [shape: f32[1,1,96], index: 2, kind: input, shape index: {}]
  %s3 = inlined_call_operand.hbm [shape: bf16[1,32,32], index: 3, kind: input, shape index: {}]
  %s4 = inlined_call_operand.vmem [shape: f32[1,32], index: 4, kind: input, shape index: {}]
  %s5 = inlined_call_operand.hbm [shape: f32[2,8,32], index: 5, kind: output, shape index: {0}]
  %s6 = inlined_call_operand.hbm [shape: f32[2,4,8,8], index: 6, kind: output, shape index: {1}]
  %7 = xla_tuple %s5, %s6
  %s8 = sld [smem:[#allocation0]]
  $region81: #{tpu_custom_call.1} parent=0
    _
  %s10 = ssub.s32 1, %s8
  %s11 = scalar_select 0, %s10, %s8
  $region1: #{tpu_custom_call.1} parent=0
    #allocation3 [shape = 'u8[4096]{0}', space=vmem, size = 0x1000, scoped, tag = 'input window, operand 0']
    #allocation4 [shape = 's32[2]{0}', space=sflag, size = 0x8, scoped, tag = 'scoped memory for tpu_custom_call.1']
    #allocation5 [shape = 's32[2]{0}', space=sflag, size = 0x8, scoped, tag = 'scoped memory for tpu_custom_call.1']
    #allocation6 [shape = 'u8[8192]{0}', space=vmem, size = 0x2000, scoped, tag = 'input window, operand 1, single buffered']
    #allocation7 [shape = 's32[1]{0}', space=sflag, size = 0x4, scoped, tag = 'scoped memory for tpu_custom_call.1']
    #allocation8 [shape = 'u8[8192]{0}', space=vmem, size = 0x2000, scoped, tag = 'input window, operand 3, single buffered']
    #allocation9 [shape = 'u8[8192]{0}', space=vmem, size = 0x2000, scoped, tag = 'output window, operand 0']
    #allocation10 [shape = 'u8[32768]{0}', space=vmem, size = 0x8000, scoped, tag = 'output window, operand 1']
    #allocation11 [shape = 's32[2]{0}', space=sflag, size = 0x8, scoped, tag = 'scoped memory for tpu_custom_call.1']
    %12 = vsyncpa [#allocation4], 0
    %s13 = scalar_lea.sflag [#allocation4], 1
    %14 = vsyncpa %s13, 0
    %15 = vsyncpa [#allocation7], 0
    %16 = vsyncpa [#allocation5], 0
    %s17 = scalar_lea.sflag [#allocation5], 1
    %18 = vsyncpa %s17, 0
    %19 = vsyncpa [#allocation11], 0
    %s20 = scalar_lea.sflag [#allocation11], 1
    %21 = vsyncpa %s20, 0
    loop: start=0, step=1, limit=4
    $region2: #{tpu_custom_call.1} parent=1 // loop_pre_header
      _
    $region3: #{tpu_custom_call.1} parent=1 // loop_header
      %s23 = sphi 0, %s27
      %p24 = scmp.ge.s32.totalorder %s23, 4
      %s30 = sphi 0, %s42
      %s31 = sphi 0, %s38
      %s32 = sphi 0, %s30
      %s33 = sphi 0, %s31
      %s34 = sphi 0, %s32
      %s35 = sphi 0, %s33
      %s45 = sphi 0, %s47
      %s48 = sphi 0, %s45
      %s49 = sphi 0, %s48
      %s65 = sphi 0, %s49
      %s71 = sphi 0, %s73
      %s74 = sphi 0, %s71
      %s75 = sphi 0, %s74
      %s91 = sphi 0, %s75
      %s97 = sphi 0, %s99
      %s100 = sphi 0, %s97
      %s101 = sphi 0, %s100
      %s117 = sphi 0, %s101
      %s123 = sphi 0, %s125
      %s126 = sphi 0, %s123
      %s127 = sphi 0, %s126
      %s143 = sphi 0, %s127
      %s147 = sphi 0, %s147
      %s149 = sphi 0, %s147
      %s150 = sphi 0, %s149
      %s164 = sphi 0, %s150
      %s170 = sphi 0, %s172
      %s173 = sphi 0, %s170
      %s174 = sphi 0, %s173
      %s190 = sphi 0, %s174
      %s198 = sphi 0, %s200
      %s201 = sphi 0, %s198
      %s202 = sphi 0, %s201
      %s218 = sphi 0, %s202
    $region4: #{tpu_custom_call.1} parent=1 // loop_header_branch
      %26 = sbr.rel (%p24) target = $region8
    $region5: #{tpu_custom_call.1} parent=1 // loop_body
      %s28 = ssub.s32 %s23, 1
      %s29 = ssub.s32 %s23, 2
      %s36 = sadd.s32 1, %s31
      %p37 = scmp.ge.s32.totalorder %s36, 1
      %s38 = scalar_select %p37, 0, %s36
      %s39 = sadd.s32 1, %s30
      %s40 = scalar_select %p37, %s39, %s30
      %p41 = scmp.ge.s32.totalorder %s40, 2
      %s42 = scalar_select %p41, 0, %s40
      %s43 = ssub.s32 %s30, %s42
      %p44 = scmp.eq.s32.totalorder %s43, 0
      %s46 = sadd.s32 %s45, 1
      %s47 = scalar_select %p44, %s45, %s46
      %p50 = pneg %p44
      %p51 = scmp.eq.s32.totalorder %s23, 1
      %p52 = por %p50, %p51
      %p53 = scmp.ne.s32.totalorder %s45, %s48
      %p54 = scmp.eq.s32.totalorder %s23, 0
      %p55 = por %p53, %p54
      %p56 = scmp.ne.s32.totalorder %s45, %s48
      %p57 = scmp.eq.s32.totalorder %s28, 1
      %p58 = por %p56, %p57
      %p59 = scmp.ne.s32.totalorder %s48, %s49
      %p60 = scmp.eq.s32.totalorder %s28, 0
      %p61 = por %p59, %p60
      %p62 = scmp.ne.s32.totalorder %s48, %s49
      %p63 = scmp.eq.s32.totalorder %s29, 1
      %p64 = por %p62, %p63
      %p66 = scmp.ne.s32.totalorder %s49, %s65
      %p67 = scmp.eq.s32.totalorder %s29, 0
      %p68 = por %p66, %p67
      %s69 = ssub.s32 %s31, %s38
      %p70 = scmp.eq.s32.totalorder %s69, 0
      %s72 = sadd.s32 %s71, 1
      %s73 = scalar_select %p70, %s71, %s72
      %p76 = pneg %p70
      %p77 = scmp.eq.s32.totalorder %s23, 1
      %p78 = por %p76, %p77
      %p79 = scmp.ne.s32.totalorder %s71, %s74
      %p80 = scmp.eq.s32.totalorder %s23, 0
      %p81 = por %p79, %p80
      %p82 = scmp.ne.s32.totalorder %s71, %s74
      %p83 = scmp.eq.s32.totalorder %s28, 1
      %p84 = por %p82, %p83
      %p85 = scmp.ne.s32.totalorder %s74, %s75
      %p86 = scmp.eq.s32.totalorder %s28, 0
      %p87 = por %p85, %p86
      %p88 = scmp.ne.s32.totalorder %s74, %s75
      %p89 = scmp.eq.s32.totalorder %s29, 1
      %p90 = por %p88, %p89
      %p92 = scmp.ne.s32.totalorder %s75, %s91
      %p93 = scmp.eq.s32.totalorder %s29, 0
      %p94 = por %p92, %p93
      %s95 = ssub.s32 %s31, %s38
      %p96 = scmp.eq.s32.totalorder %s95, 0
      %s98 = sadd.s32 %s97, 1
      %s99 = scalar_select %p96, %s97, %s98
      %p102 = pneg %p96
      %p103 = scmp.eq.s32.totalorder %s23, 1
      %p104 = por %p102, %p103
      %p105 = scmp.ne.s32.totalorder %s97, %s100
      %p106 = scmp.eq.s32.totalorder %s23, 0
      %p107 = por %p105, %p106
      %p108 = scmp.ne.s32.totalorder %s97, %s100
      %p109 = scmp.eq.s32.totalorder %s28, 1
      %p110 = por %p108, %p109
      %p111 = scmp.ne.s32.totalorder %s100, %s101
      %p112 = scmp.eq.s32.totalorder %s28, 0
      %p113 = por %p111, %p112
      %p114 = scmp.ne.s32.totalorder %s100, %s101
      %p115 = scmp.eq.s32.totalorder %s29, 1
      %p116 = por %p114, %p115
      %p118 = scmp.ne.s32.totalorder %s101, %s117
      %p119 = scmp.eq.s32.totalorder %s29, 0
      %p120 = por %p118, %p119
      %s121 = ssub.s32 %s31, %s38
      %p122 = scmp.eq.s32.totalorder %s121, 0
      %s124 = sadd.s32 %s123, 1
      %s125 = scalar_select %p122, %s123, %s124
      %p128 = pneg %p122
      %p129 = scmp.eq.s32.totalorder %s23, 1
      %p130 = por %p128, %p129
      %p131 = scmp.ne.s32.totalorder %s123, %s126
      %p132 = scmp.eq.s32.totalorder %s23, 0
      %p133 = por %p131, %p132
      %p134 = scmp.ne.s32.totalorder %s123, %s126
      %p135 = scmp.eq.s32.totalorder %s28, 1
      %p136 = por %p134, %p135
      %p137 = scmp.ne.s32.totalorder %s126, %s127
      %p138 = scmp.eq.s32.totalorder %s28, 0
      %p139 = por %p137, %p138
      %p140 = scmp.ne.s32.totalorder %s126, %s127
      %p141 = scmp.eq.s32.totalorder %s29, 1
      %p142 = por %p140, %p141
      %p144 = scmp.ne.s32.totalorder %s127, %s143
      %p145 = scmp.eq.s32.totalorder %s29, 0
      %p146 = por %p144, %p145
      %s148 = sadd.s32 %s147, 1
      %p151 = scmp.eq.s32.totalorder %s23, 1
      %p152 = scmp.ne.s32.totalorder %s147, %s149
      %p153 = scmp.eq.s32.totalorder %s23, 0
      %p154 = por %p152, %p153
      %p155 = scmp.ne.s32.totalorder %s147, %s149
      %p156 = scmp.eq.s32.totalorder %s28, 1
      %p157 = por %p155, %p156
      %p158 = scmp.ne.s32.totalorder %s149, %s150
      %p159 = scmp.eq.s32.totalorder %s28, 0
      %p160 = por %p158, %p159
      %p161 = scmp.ne.s32.totalorder %s149, %s150
      %p162 = scmp.eq.s32.totalorder %s29, 1
      %p163 = por %p161, %p162
      %p165 = scmp.ne.s32.totalorder %s150, %s164
      %p166 = scmp.eq.s32.totalorder %s29, 0
      %p167 = por %p165, %p166
      %s168 = ssub.s32 %s30, %s42
      %p169 = scmp.eq.s32.totalorder %s168, 0
      %s171 = sadd.s32 %s170, 1
      %s172 = scalar_select %p169, %s170, %s171
      %p175 = pneg %p169
      %p176 = scmp.eq.s32.totalorder %s23, 1
      %p177 = por %p175, %p176
      %p178 = scmp.ne.s32.totalorder %s170, %s173
      %p179 = scmp.eq.s32.totalorder %s23, 0
      %p180 = por %p178, %p179
      %p181 = scmp.ne.s32.totalorder %s170, %s173
      %p182 = scmp.eq.s32.totalorder %s28, 1
      %p183 = por %p181, %p182
      %p184 = scmp.ne.s32.totalorder %s173, %s174
      %p185 = scmp.eq.s32.totalorder %s28, 0
      %p186 = por %p184, %p185
      %p187 = scmp.ne.s32.totalorder %s173, %s174
      %p188 = scmp.eq.s32.totalorder %s29, 1
      %p189 = por %p187, %p188
      %p191 = scmp.ne.s32.totalorder %s174, %s190
      %p192 = scmp.eq.s32.totalorder %s29, 0
      %p193 = por %p191, %p192
      %s194 = ssub.s32 %s30, %s42
      %s195 = ssub.s32 %s31, %s38
      %s196 = sor.u32 %s194, %s195
      %p197 = scmp.eq.s32.totalorder %s196, 0
      %s199 = sadd.s32 %s198, 1
      %s200 = scalar_select %p197, %s198, %s199
      %p203 = pneg %p197
      %p204 = scmp.eq.s32.totalorder %s23, 1
      %p205 = por %p203, %p204
      %p206 = scmp.ne.s32.totalorder %s198, %s201
      %p207 = scmp.eq.s32.totalorder %s23, 0
      %p208 = por %p206, %p207
      %p209 = scmp.ne.s32.totalorder %s198, %s201
      %p210 = scmp.eq.s32.totalorder %s28, 1
      %p211 = por %p209, %p210
      %p212 = scmp.ne.s32.totalorder %s201, %s202
      %p213 = scmp.eq.s32.totalorder %s28, 0
      %p214 = por %p212, %p213
      %p215 = scmp.ne.s32.totalorder %s201, %s202
      %p216 = scmp.eq.s32.totalorder %s29, 1
      %p217 = por %p215, %p216
      %p219 = scmp.ne.s32.totalorder %s202, %s218
      %p220 = scmp.eq.s32.totalorder %s29, 0
      %p221 = por %p219, %p220
      %p222 = scmp.le.s32.totalorder 1, %s23
      %p223 = scmp.lt.s32.totalorder %s23, 3
      %p224 = pnand %p222, %p223
      %p225 = pneg %p224
      // Predicated region
      $region9: #{tpu_custom_call.1} parent=5 // pred_check
        _
      $region10: #{tpu_custom_call.1} parent=5 // pred_check_branch
        %227 = sbr.rel (%p224) target = $region12
      $region11: #{tpu_custom_call.1} parent=5 // pred_region
        %s228 = ssub.s32 %s23, 1
        // Predicated region
        $region13: #{tpu_custom_call.1} parent=11 // pred_check
          %p229 = pneg %p87
        $region14: #{tpu_custom_call.1} parent=11 // pred_check_branch
          %231 = sbr.rel (%p229) target = $region16
        $region15: #{tpu_custom_call.1} parent=11 // pred_region
          %s233 = ssub.s32 256, 256
          %234 = vsyncadd [#allocation7], %s233
          %s235 = smul.addr %s33, 4
          %s236 = smul.addr %s235, 64
          %s237 = scalar_lea.hbm %s1, %s236
          %s238 = sshll.u32 [#allocation6], 4
          %s239 = int_to_ptr.vmem [resolvable:$true] %s238
          %244 = dma.hbm_to_vmem [thread:$0]  %s237, 256, %s239, [#allocation7], 64, 64, 4
        $region16: #{tpu_custom_call.1} parent=11 // pred_fallthru
          _
        // Predicated region
        $region17: #{tpu_custom_call.1} parent=11 // pred_check
          %p245 = pneg %p113
        $region18: #{tpu_custom_call.1} parent=11 // pred_check_branch
          %247 = sbr.rel (%p245) target = $region20
        $region19: #{tpu_custom_call.1} parent=11 // pred_region
          %p248 = scmp.lt.s32.totalorder %s33, 0
          %s249 = scalar_select %p248, %s33, 0
          %s250 = scalar_lea.vmem %s2, %s249
        $region20: #{tpu_custom_call.1} parent=11 // pred_fallthru
          _
        // Predicated region
        $region21: #{tpu_custom_call.1} parent=11 // pred_check
          %p251 = pneg %p139
        $region22: #{tpu_custom_call.1} parent=11 // pred_check_branch
          %253 = sbr.rel (%p251) target = $region24
        $region23: #{tpu_custom_call.1} parent=11 // pred_region
          %s255 = ssub.s32 256, 256
          %256 = vsyncadd [#allocation7], %s255
          %s257 = smul.addr %s33, 4
          %s258 = smul.addr %s257, 64
          %s259 = scalar_lea.hbm %s3, %s258
          %s260 = sshll.u32 [#allocation8], 4
          %s261 = int_to_ptr.vmem [resolvable:$true] %s260
          %266 = dma.hbm_to_vmem [thread:$0]  %s259, 256, %s261, [#allocation7], 64, 64, 4
        $region24: #{tpu_custom_call.1} parent=11 // pred_fallthru
          _
        // Predicated region
        $region25: #{tpu_custom_call.1} parent=11 // pred_check
          %p267 = pneg %p160
        $region26: #{tpu_custom_call.1} parent=11 // pred_check_branch
          %269 = sbr.rel (%p267) target = $region28
        $region27: #{tpu_custom_call.1} parent=11 // pred_region
          _
        $region28: #{tpu_custom_call.1} parent=11 // pred_fallthru
          _
      $region12: #{tpu_custom_call.1} parent=5 // pred_fallthru
        _
      %p270 = scmp.lt.s32.totalorder %s23, 2
      // Predicated region
      $region29: #{tpu_custom_call.1} parent=5 // pred_check
        %p271 = pneg %p270
      $region30: #{tpu_custom_call.1} parent=5 // pred_check_branch
        %273 = sbr.rel (%p271) target = $region32
      $region31: #{tpu_custom_call.1} parent=5 // pred_region
        // Predicated region
        $region33: #{tpu_custom_call.1} parent=31 // pred_check
          %p274 = pneg %p55
        $region34: #{tpu_custom_call.1} parent=31 // pred_check_branch
          %276 = sbr.rel (%p274) target = $region36
        $region35: #{tpu_custom_call.1} parent=31 // pred_region
          %s277 = sand.u32 %s45, 1
          %s278 = scalar_lea.sflag [#allocation4], %s277
          %s279 = sand.u32 %s45, 1
          %s280 = smul.addr %s279, 4
          %s281 = scalar_lea.vmem [#allocation3], %s280
          %s283 = ssub.s32 64, 64
          %284 = vsyncadd %s278, %s283
          %s285 = smul.addr %s30, 64
          %s286 = scalar_lea.hbm %s0, %s285
          %s288 = sshll.u32 %s281, 4
          %s289 = int_to_ptr.vmem [resolvable:$true] %s288
          %291 = dma.hbm_to_vmem [thread:$0]  %s286, 64, %s289, %s278
        $region36: #{tpu_custom_call.1} parent=31 // pred_fallthru
          _
      $region32: #{tpu_custom_call.1} parent=5 // pred_fallthru
        _
      %p292 = scmp.le.s32.totalorder 1, %s23
      %p293 = scmp.lt.s32.totalorder %s23, 3
      %p294 = pnand %p292, %p293
      %p295 = pneg %p294
      // Predicated region
      $region37: #{tpu_custom_call.1} parent=5 // pred_check
        _
      $region38: #{tpu_custom_call.1} parent=5 // pred_check_branch
        %297 = sbr.rel (%p294) target = $region40
      $region39: #{tpu_custom_call.1} parent=5 // pred_region
        %s298 = ssub.s32 %s23, 1
        %s299 = sand.u32 %s48, 1
        %s300 = scalar_lea.sflag [#allocation4], %s299
        %s301 = sand.u32 %s48, 1
        %s302 = smul.addr %s301, 4
        %s303 = scalar_lea.vmem [#allocation3], %s302
        // Predicated region
        $region41: #{tpu_custom_call.1} parent=39 // pred_check
          %p304 = pneg %p61
        $region42: #{tpu_custom_call.1} parent=39 // pred_check_branch
          %306 = sbr.rel (%p304) target = $region44
        $region43: #{tpu_custom_call.1} parent=39 // pred_region
          %307 = dma.done %s300, 64
        $region44: #{tpu_custom_call.1} parent=39 // pred_fallthru
          _
        // Predicated region
        $region45: #{tpu_custom_call.1} parent=39 // pred_check
          %p308 = pneg %p87
        $region46: #{tpu_custom_call.1} parent=39 // pred_check_branch
          %310 = sbr.rel (%p308) target = $region48
        $region47: #{tpu_custom_call.1} parent=39 // pred_region
          %311 = dma.done [#allocation7], 256
        $region48: #{tpu_custom_call.1} parent=39 // pred_fallthru
          _
        // Predicated region
        $region49: #{tpu_custom_call.1} parent=39 // pred_check
          %p312 = pneg %p139
        $region50: #{tpu_custom_call.1} parent=39 // pred_check_branch
          %314 = sbr.rel (%p312) target = $region52
        $region51: #{tpu_custom_call.1} parent=39 // pred_region
          %315 = dma.done [#allocation7], 256
        $region52: #{tpu_custom_call.1} parent=39 // pred_fallthru
          _
        %s316 = sand.u32 %s48, 1
        %s317 = scalar_lea.sflag [#allocation4], %s316
        %s318 = sand.u32 %s48, 1
        %s319 = smul.addr %s318, 4
        %s320 = scalar_lea.vmem [#allocation3], %s319
        %p321 = pneg %p61
        %p322 = pneg %p58
        %p323 = pneg %p87
        %p324 = pneg %p84
        %p325 = scmp.lt.s32.totalorder %s33, 0
        %s326 = scalar_select %p325, %s33, 0
        %s327 = scalar_lea.vmem %s2, %s326
        %p328 = pneg %p113
        %p329 = pneg %p110
        %p330 = pneg %p139
        %p331 = pneg %p136
        %p332 = pneg %p160
        %p333 = pneg %p157
        %p334 = pneg %p186
        %p335 = pneg %p183
        %s336 = sand.u32 %s173, 1
        %s337 = scalar_lea.sflag [#allocation5], %s336
        %s338 = sand.u32 %s173, 1
        %s339 = smul.addr %s338, 8
        %s340 = scalar_lea.vmem [#allocation9], %s339
        %p341 = pneg %p214
        %p342 = pneg %p211
        %s343 = sand.u32 %s201, 1
        %s344 = scalar_lea.sflag [#allocation11], %s343
        %s345 = sand.u32 %s201, 1
        %s346 = smul.addr %s345, 32
        %s347 = scalar_lea.vmem [#allocation10], %s346
        %p348 = scmp.lt.s32.totalorder %s33, 0
        %s349 = scalar_select %p348, %s33, 0
        %s350 = scalar_lea.vmem %s2, %s349
        %s351 = smul.u32 4, %s33
        %p353 = scmp.eq.s32.totalorder %s33, 0
        // Predicated region
        $region53: #{tpu_custom_call.1} parent=39 // pred_check
          %p354 = pneg %p353
        $region54: #{tpu_custom_call.1} parent=39 // pred_check_branch
          %356 = sbr.rel (%p354) target = $region56
        $region55: #{tpu_custom_call.1} parent=39 // pred_region
          %vm357 = vcmask 261120
          %358 = vst.msk [vmem:[#allocation2] sm:$0xff] %vm357, 0.0
        $region56: #{tpu_custom_call.1} parent=39 // pred_fallthru
          _
        %v359 = vld [vmem:[%s303] sm:$0xf]
        %v360 = vld [vmem:[#allocation6] sm:$0xf]
        %v361 = vld [vmem:[#allocation6 + $0x4] sm:$0xf]
        %v362 = vld [vmem:[#allocation6 + $0x8] sm:$0xf]
        %v363 = vld [vmem:[#allocation6 + $0xc] sm:$0xf]
        %v364 = vld [vmem:[%s350] sm:$0x1]
        %v366 = vlaneseq
        %v367 = vshrl.u32 %v366, 7
        %v368 = vsub.s32 0, %v367
        %v369 = vrot.slane %v364, %v368
        %v375 = vunpack.c.l.b16 %v360
        %v376 = vunpack.c.l.b16 %v361
        %v377 = vunpack.c.l.b16 %v362
        %v378 = vunpack.c.l.b16 %v363
        %v379 = vpack.c.b16 %v376, %v375
        %v380 = vpack.c.b16 %v378, %v377
        %vm383 = vcmask 261120
        %v385 = vsel %vm383, %v359, 0
        %387 = vmatprep.subr.bf16.mxu0 0
        %388 = vmatpush1.bf16.msra.mxu0 %v379
        %389 = vmatprep.subr.bf16.mxu0 0
        %390 = vmatpush1.bf16.msra.mxu0 %v380
        %391 = vmatprep.subr.bf16.mxu0 0
        %392 = vmatpush1.bf16.msra.mxu0 0
        %393 = vmatprep.subr.bf16.mxu0 0
        %394 = vmatpush1.bf16.msra.mxu0 0
        %395 = vmatprep.subr.bf16.mxu0 0
        %396 = vmatpush1.bf16.msra.mxu0 0
        %397 = vmatprep.subr.bf16.mxu0 0
        %398 = vmatpush1.bf16.msra.mxu0 0
        %399 = vmatprep.subr.bf16.mxu0 0
        %400 = vmatpush1.bf16.msra.mxu0 0
        %401 = vmatprep.subr.bf16.mxu0 0
        %402 = vmatpush1.bf16.msra.mxu0 0
        %403 = vmatprep.subr.bf16.mxu0 0
        %404 = vmatpush1.bf16.msra.mxu0 0
        %405 = vmatprep.subr.bf16.mxu0 0
        %406 = vmatpush1.bf16.msra.mxu0 0
        %407 = vmatprep.subr.bf16.mxu0 0
        %408 = vmatpush1.bf16.msra.mxu0 0
        %409 = vmatprep.subr.bf16.mxu0 0
        %410 = vmatpush1.bf16.msra.mxu0 0
        %411 = vmatprep.subr.bf16.mxu0 0
        %412 = vmatpush1.bf16.msra.mxu0 0
        %413 = vmatprep.subr.bf16.mxu0 0
        %414 = vmatpush1.bf16.msra.mxu0 0
        %415 = vmatprep.subr.bf16.mxu0 0
        %416 = vmatpush1.bf16.msra.mxu0 0
        %417 = vmatprep.subr.bf16.mxu0 0
        %418 = vmatpush1.bf16.msra.mxu0 0
        %419 = vmatprep.mubr.bf16.mxu0 0
        %420 = vmatmul.mubr.bf16.gmra.mrb[0].mxu0 %v385
        %v421 = vpop.f32.mrb[0].mxu0
        %v422 = vadd.f32 %v369, %v421
        %v423 = vpop.f32.mrb[0].mxu0
        %v424 = vpop.f32.mrb[0].mxu0
        %v425 = vpop.f32.mrb[0].mxu0
        %426 = vdwg.mxu0
        %v427 = vpack.c.bf16 %v422, %v422
        %429 = vrot.lane.b32.xlu0 %v427, 96
        %v430 = vpop.permute.xlu0 %429
        %vm431 = vcmask 64512
        %v433 = vsel %vm431, %v427, 0
        %v436 = vsel %vm431, %v430, 0
        %438 = vmatprep.subr.bf16.mxu0 0
        %439 = vmatpush1.bf16.xpose.msra.mxu0 %v436
        %440 = vmatprep.subr.bf16.mxu0 0
        %441 = vmatpush1.bf16.xpose.msra.mxu0 0
        %442 = vmatprep.subr.bf16.mxu0 0
        %443 = vmatpush1.bf16.xpose.msra.mxu0 0
        %444 = vmatprep.subr.bf16.mxu0 0
        %445 = vmatpush1.bf16.xpose.msra.mxu0 0
        %446 = vmatprep.subr.bf16.mxu0 0
        %447 = vmatpush1.bf16.xpose.msra.mxu0 0
        %448 = vmatprep.subr.bf16.mxu0 0
        %449 = vmatpush1.bf16.xpose.msra.mxu0 0
        %450 = vmatprep.subr.bf16.mxu0 0
        %451 = vmatpush1.bf16.xpose.msra.mxu0 0
        %452 = vmatprep.subr.bf16.mxu0 0
        %453 = vmatpush1.bf16.xpose.msra.mxu0 0
        %454 = vmatprep.subr.bf16.mxu0 0
        %455 = vmatpush1.bf16.xpose.msra.mxu0 0
        %456 = vmatprep.subr.bf16.mxu0 0
        %457 = vmatpush1.bf16.xpose.msra.mxu0 0
        %458 = vmatprep.subr.bf16.mxu0 0
        %459 = vmatpush1.bf16.xpose.msra.mxu0 0
        %460 = vmatprep.subr.bf16.mxu0 0
        %461 = vmatpush1.bf16.xpose.msra.mxu0 0
        %462 = vmatprep.subr.bf16.mxu0 0
        %463 = vmatpush1.bf16.xpose.msra.mxu0 0
        %464 = vmatprep.subr.bf16.mxu0 0
        %465 = vmatpush1.bf16.xpose.msra.mxu0 0
        %466 = vmatprep.subr.bf16.mxu0 0
        %467 = vmatpush1.bf16.xpose.msra.mxu0 0
        %468 = vmatprep.subr.bf16.mxu0 0
        %469 = vmatpush1.bf16.xpose.msra.mxu0 0
        %470 = vmatprep.mubr.bf16.mxu0 0
        %471 = vmatmul.mubr.bf16.gmra.mrb[0].mxu0 %v433
        %v472 = vpop.f32.mrb[0].mxu0
        %v473 = vadd.f32 0.0, %v472
        %v474 = vpop.f32.mrb[0].mxu0
        %v475 = vpop.f32.mrb[0].mxu0
        %v476 = vpop.f32.mrb[0].mxu0
        %477 = vdwg.mxu0
        %v478 = vsel %vm431, %v473, -inf
        %479 = vmax.xlane.f32.xlu0 %v478
        %v480 = vpop.xlane.xlu0 %479
        %v481 = vsub.f32 %v473, %v480
        %v482 = vmul.f32 %v481, 1.442695
        %v483 = vpow.pop %v482
        %v484 = vsel %vm431, %v483, 0.0
        %485 = vadd.xlane.f32.xlu0 %v484
        %v486 = vpop.xlane.xlu0 %485
        %v487 = vrcp.pop %v486
        %v488 = vmul.f32 %v483, %v487
        %v489 = vpack.c.bf16 %v488, %v488
        %490 = vst.msk [vmem:[%s347] sm:$0xff] %vm431, %v488
        %491 = vrot.lane.b32.xlu0 %v427, 64
        %v492 = vpop.permute.xlu0 %491
        %v494 = vsel %vm431, %v489, 0
        %vm496 = vcmask 1043456
        %v498 = vsel %vm496, %v492, 0
        %500 = vmatprep.subr.bf16.mxu0 0
        %501 = vmatpush1.bf16.msra.mxu0 %v498
        %502 = vmatprep.subr.bf16.mxu0 0
        %503 = vmatpush1.bf16.msra.mxu0 0
        %504 = vmatprep.subr.bf16.mxu0 0
        %505 = vmatpush1.bf16.msra.mxu0 0
        %506 = vmatprep.subr.bf16.mxu0 0
        %507 = vmatpush1.bf16.msra.mxu0 0
        %508 = vmatprep.subr.bf16.mxu0 0
        %509 = vmatpush1.bf16.msra.mxu0 0
        %510 = vmatprep.subr.bf16.mxu0 0
        %511 = vmatpush1.bf16.msra.mxu0 0
        %512 = vmatprep.subr.bf16.mxu0 0
        %513 = vmatpush1.bf16.msra.mxu0 0
        %514 = vmatprep.subr.bf16.mxu0 0
        %515 = vmatpush1.bf16.msra.mxu0 0
        %516 = vmatprep.subr.bf16.mxu0 0
        %517 = vmatpush1.bf16.msra.mxu0 0
        %518 = vmatprep.subr.bf16.mxu0 0
        %519 = vmatpush1.bf16.msra.mxu0 0
        %520 = vmatprep.subr.bf16.mxu0 0
        %521 = vmatpush1.bf16.msra.mxu0 0
        %522 = vmatprep.subr.bf16.mxu0 0
        %523 = vmatpush1.bf16.msra.mxu0 0
        %524 = vmatprep.subr.bf16.mxu0 0
        %525 = vmatpush1.bf16.msra.mxu0 0
        %526 = vmatprep.subr.bf16.mxu0 0
        %527 = vmatpush1.bf16.msra.mxu0 0
        %528 = vmatprep.subr.bf16.mxu0 0
        %529 = vmatpush1.bf16.msra.mxu0 0
        %530 = vmatprep.subr.bf16.mxu0 0
        %531 = vmatpush1.bf16.msra.mxu0 0
        %532 = vmatprep.mubr.bf16.mxu0 0
        %533 = vmatmul.mubr.bf16.gmra.mrb[0].mxu0 %v494
        %v534 = vpop.f32.mrb[0].mxu0
        %v535 = vadd.f32 0.0, %v534
        %v536 = vpop.f32.mrb[0].mxu0
        %v537 = vpop.f32.mrb[0].mxu0
        %v538 = vpop.f32.mrb[0].mxu0
        %539 = vdwg.mxu0
        %540 = vrot.lane.b32.xlu0 %v427, 120
        %v541 = vpop.permute.xlu0 %540
        %542 = vrot.lane.b32.xlu0 %v427, 88
        %v543 = vpop.permute.xlu0 %542
        %v545 = vsel %vm431, %v541, 0
        %v548 = vsel %vm431, %v543, 0
        %550 = vmatprep.subr.bf16.mxu0 0
        %551 = vmatpush1.bf16.xpose.msra.mxu0 %v548
        %552 = vmatprep.subr.bf16.mxu0 0
        %553 = vmatpush1.bf16.xpose.msra.mxu0 0
        %554 = vmatprep.subr.bf16.mxu0 0
        %555 = vmatpush1.bf16.xpose.msra.mxu0 0
        %556 = vmatprep.subr.bf16.mxu0 0
        %557 = vmatpush1.bf16.xpose.msra.mxu0 0
        %558 = vmatprep.subr.bf16.mxu0 0
        %559 = vmatpush1.bf16.xpose.msra.mxu0 0
        %560 = vmatprep.subr.bf16.mxu0 0
        %561 = vmatpush1.bf16.xpose.msra.mxu0 0
        %562 = vmatprep.subr.bf16.mxu0 0
        %563 = vmatpush1.bf16.xpose.msra.mxu0 0
        %564 = vmatprep.subr.bf16.mxu0 0
        %565 = vmatpush1.bf16.xpose.msra.mxu0 0
        %566 = vmatprep.subr.bf16.mxu0 0
        %567 = vmatpush1.bf16.xpose.msra.mxu0 0
        %568 = vmatprep.subr.bf16.mxu0 0
        %569 = vmatpush1.bf16.xpose.msra.mxu0 0
        %570 = vmatprep.subr.bf16.mxu0 0
        %571 = vmatpush1.bf16.xpose.msra.mxu0 0
        %572 = vmatprep.subr.bf16.mxu0 0
        %573 = vmatpush1.bf16.xpose.msra.mxu0 0
        %574 = vmatprep.subr.bf16.mxu0 0
        %575 = vmatpush1.bf16.xpose.msra.mxu0 0
        %576 = vmatprep.subr.bf16.mxu0 0
        %577 = vmatpush1.bf16.xpose.msra.mxu0 0
        %578 = vmatprep.subr.bf16.mxu0 0
        %579 = vmatpush1.bf16.xpose.msra.mxu0 0
        %580 = vmatprep.subr.bf16.mxu0 0
        %581 = vmatpush1.bf16.xpose.msra.mxu0 0
        %582 = vmatprep.mubr.bf16.mxu0 0
        %583 = vmatmul.mubr.bf16.gmra.mrb[0].mxu0 %v545
        %v584 = vpop.f32.mrb[0].mxu0
        %v585 = vadd.f32 0.0, %v584
        %v586 = vpop.f32.mrb[0].mxu0
        %v587 = vpop.f32.mrb[0].mxu0
        %v588 = vpop.f32.mrb[0].mxu0
        %589 = vdwg.mxu0
        %v590 = vsel %vm431, %v585, -inf
        %591 = vmax.xlane.f32.xlu0 %v590
        %v592 = vpop.xlane.xlu0 %591
        %v593 = vsub.f32 %v585, %v592
        %v594 = vmul.f32 %v593, 1.442695
        %v595 = vpow.pop %v594
        %v596 = vsel %vm431, %v595, 0.0
        %597 = vadd.xlane.f32.xlu0 %v596
        %v598 = vpop.xlane.xlu0 %597
        %v599 = vrcp.pop %v598
        %v600 = vmul.f32 %v595, %v599
        %v601 = vpack.c.bf16 %v600, %v600
        %s602 = scalar_lea.vmem %s347, 8 [#allocation10]
        %603 = vst.msk [vmem:[%s602] sm:$0xff] %vm431, %v600
        %604 = vrot.lane.b32.xlu0 %v427, 56
        %v605 = vpop.permute.xlu0 %604
        %v607 = vsel %vm431, %v601, 0
        %v610 = vsel %vm496, %v605, 0
        %612 = vmatprep.subr.bf16.mxu0 0
        %613 = vmatpush1.bf16.msra.mxu0 %v610
        %614 = vmatprep.subr.bf16.mxu0 0
        %615 = vmatpush1.bf16.msra.mxu0 0
        %616 = vmatprep.subr.bf16.mxu0 0
        %617 = vmatpush1.bf16.msra.mxu0 0
        %618 = vmatprep.subr.bf16.mxu0 0
        %619 = vmatpush1.bf16.msra.mxu0 0
        %620 = vmatprep.subr.bf16.mxu0 0
        %621 = vmatpush1.bf16.msra.mxu0 0
        %622 = vmatprep.subr.bf16.mxu0 0
        %623 = vmatpush1.bf16.msra.mxu0 0
        %624 = vmatprep.subr.bf16.mxu0 0
        %625 = vmatpush1.bf16.msra.mxu0 0
        %626 = vmatprep.subr.bf16.mxu0 0
        %627 = vmatpush1.bf16.msra.mxu0 0
        %628 = vmatprep.subr.bf16.mxu0 0
        %629 = vmatpush1.bf16.msra.mxu0 0
        %630 = vmatprep.subr.bf16.mxu0 0
        %631 = vmatpush1.bf16.msra.mxu0 0
        %632 = vmatprep.subr.bf16.mxu0 0
        %633 = vmatpush1.bf16.msra.mxu0 0
        %634 = vmatprep.subr.bf16.mxu0 0
        %635 = vmatpush1.bf16.msra.mxu0 0
        %636 = vmatprep.subr.bf16.mxu0 0
        %637 = vmatpush1.bf16.msra.mxu0 0
        %638 = vmatprep.subr.bf16.mxu0 0
        %639 = vmatpush1.bf16.msra.mxu0 0
        %640 = vmatprep.subr.bf16.mxu0 0
        %641 = vmatpush1.bf16.msra.mxu0 0
        %642 = vmatprep.subr.bf16.mxu0 0
        %643 = vmatpush1.bf16.msra.mxu0 0
        %644 = vmatprep.mubr.bf16.mxu0 0
        %645 = vmatmul.mubr.bf16.gmra.mrb[0].mxu0 %v607
        %v646 = vpop.f32.mrb[0].mxu0
        %v647 = vadd.f32 0.0, %v646
        %v648 = vpop.f32.mrb[0].mxu0
        %v649 = vpop.f32.mrb[0].mxu0
        %v650 = vpop.f32.mrb[0].mxu0
        %651 = vdwg.mxu0
        %652 = vrot.lane.b32.xlu0 %v427, 112
        %v653 = vpop.permute.xlu0 %652
        %654 = vrot.lane.b32.xlu0 %v427, 80
        %v655 = vpop.permute.xlu0 %654
        %v657 = vsel %vm431, %v653, 0
        %v660 = vsel %vm431, %v655, 0
        %662 = vmatprep.subr.bf16.mxu0 0
        %663 = vmatpush1.bf16.xpose.msra.mxu0 %v660
        %664 = vmatprep.subr.bf16.mxu0 0
        %665 = vmatpush1.bf16.xpose.msra.mxu0 0
        %666 = vmatprep.subr.bf16.mxu0 0
        %667 = vmatpush1.bf16.xpose.msra.mxu0 0
        %668 = vmatprep.subr.bf16.mxu0 0
        %669 = vmatpush1.bf16.xpose.msra.mxu0 0
        %670 = vmatprep.subr.bf16.mxu0 0
        %671 = vmatpush1.bf16.xpose.msra.mxu0 0
        %672 = vmatprep.subr.bf16.mxu0 0
        %673 = vmatpush1.bf16.xpose.msra.mxu0 0
        %674 = vmatprep.subr.bf16.mxu0 0
        %675 = vmatpush1.bf16.xpose.msra.mxu0 0
        %676 = vmatprep.subr.bf16.mxu0 0
        %677 = vmatpush1.bf16.xpose.msra.mxu0 0
        %678 = vmatprep.subr.bf16.mxu0 0
        %679 = vmatpush1.bf16.xpose.msra.mxu0 0
        %680 = vmatprep.subr.bf16.mxu0 0
        %681 = vmatpush1.bf16.xpose.msra.mxu0 0
        %682 = vmatprep.subr.bf16.mxu0 0
        %683 = vmatpush1.bf16.xpose.msra.mxu0 0
        %684 = vmatprep.subr.bf16.mxu0 0
        %685 = vmatpush1.bf16.xpose.msra.mxu0 0
        %686 = vmatprep.subr.bf16.mxu0 0
        %687 = vmatpush1.bf16.xpose.msra.mxu0 0
        %688 = vmatprep.subr.bf16.mxu0 0
        %689 = vmatpush1.bf16.xpose.msra.mxu0 0
        %690 = vmatprep.subr.bf16.mxu0 0
        %691 = vmatpush1.bf16.xpose.msra.mxu0 0
        %692 = vmatprep.subr.bf16.mxu0 0
        %693 = vmatpush1.bf16.xpose.msra.mxu0 0
        %694 = vmatprep.mubr.bf16.mxu0 0
        %695 = vmatmul.mubr.bf16.gmra.mrb[0].mxu0 %v657
        %v696 = vpop.f32.mrb[0].mxu0
        %v697 = vadd.f32 0.0, %v696
        %v698 = vpop.f32.mrb[0].mxu0
        %v699 = vpop.f32.mrb[0].mxu0
        %v700 = vpop.f32.mrb[0].mxu0
        %701 = vdwg.mxu0
        %v702 = vsel %vm431, %v697, -inf
        %703 = vmax.xlane.f32.xlu0 %v702
        %v704 = vpop.xlane.xlu0 %703
        %v705 = vsub.f32 %v697, %v704
        %v706 = vmul.f32 %v705, 1.442695
        %v707 = vpow.pop %v706
        %v708 = vsel %vm431, %v707, 0.0
        %709 = vadd.xlane.f32.xlu0 %v708
        %v710 = vpop.xlane.xlu0 %709
        %v711 = vrcp.pop %v710
        %v712 = vmul.f32 %v707, %v711
        %v713 = vpack.c.bf16 %v712, %v712
        %s714 = scalar_lea.vmem %s347, 16 [#allocation10]
        %715 = vst.msk [vmem:[%s714] sm:$0xff] %vm431, %v712
        %716 = vrot.lane.b32.xlu0 %v427, 48
        %v717 = vpop.permute.xlu0 %716
        %v719 = vsel %vm431, %v713, 0
        %v722 = vsel %vm496, %v717, 0
        %724 = vmatprep.subr.bf16.mxu0 0
        %725 = vmatpush1.bf16.msra.mxu0 %v722
        %726 = vmatprep.subr.bf16.mxu0 0
        %727 = vmatpush1.bf16.msra.mxu0 0
        %728 = vmatprep.subr.bf16.mxu0 0
        %729 = vmatpush1.bf16.msra.mxu0 0
        %730 = vmatprep.subr.bf16.mxu0 0
        %731 = vmatpush1.bf16.msra.mxu0 0
        %732 = vmatprep.subr.bf16.mxu0 0
        %733 = vmatpush1.bf16.msra.mxu0 0
        %734 = vmatprep.subr.bf16.mxu0 0
        %735 = vmatpush1.bf16.msra.mxu0 0
        %736 = vmatprep.subr.bf16.mxu0 0
        %737 = vmatpush1.bf16.msra.mxu0 0
        %738 = vmatprep.subr.bf16.mxu0 0
        %739 = vmatpush1.bf16.msra.mxu0 0
        %740 = vmatprep.subr.bf16.mxu0 0
        %741 = vmatpush1.bf16.msra.mxu0 0
        %742 = vmatprep.subr.bf16.mxu0 0
        %743 = vmatpush1.bf16.msra.mxu0 0
        %744 = vmatprep.subr.bf16.mxu0 0
        %745 = vmatpush1.bf16.msra.mxu0 0
        %746 = vmatprep.subr.bf16.mxu0 0
        %747 = vmatpush1.bf16.msra.mxu0 0
        %748 = vmatprep.subr.bf16.mxu0 0
        %749 = vmatpush1.bf16.msra.mxu0 0
        %750 = vmatprep.subr.bf16.mxu0 0
        %751 = vmatpush1.bf16.msra.mxu0 0
        %752 = vmatprep.subr.bf16.mxu0 0
        %753 = vmatpush1.bf16.msra.mxu0 0
        %754 = vmatprep.subr.bf16.mxu0 0
        %755 = vmatpush1.bf16.msra.mxu0 0
        %756 = vmatprep.mubr.bf16.mxu0 0
        %757 = vmatmul.mubr.bf16.gmra.mrb[0].mxu0 %v719
        %v758 = vpop.f32.mrb[0].mxu0
        %v759 = vadd.f32 0.0, %v758
        %v760 = vpop.f32.mrb[0].mxu0
        %v761 = vpop.f32.mrb[0].mxu0
        %v762 = vpop.f32.mrb[0].mxu0
        %763 = vdwg.mxu0
        %764 = vrot.lane.b32.xlu0 %v427, 104
        %v765 = vpop.permute.xlu0 %764
        %766 = vrot.lane.b32.xlu0 %v427, 72
        %v767 = vpop.permute.xlu0 %766
        %v769 = vsel %vm431, %v765, 0
        %v772 = vsel %vm431, %v767, 0
        %774 = vmatprep.subr.bf16.mxu0 0
        %775 = vmatpush1.bf16.xpose.msra.mxu0 %v772
        %776 = vmatprep.subr.bf16.mxu0 0
        %777 = vmatpush1.bf16.xpose.msra.mxu0 0
        %778 = vmatprep.subr.bf16.mxu0 0
        %779 = vmatpush1.bf16.xpose.msra.mxu0 0
        %780 = vmatprep.subr.bf16.mxu0 0
        %781 = vmatpush1.bf16.xpose.msra.mxu0 0
        %782 = vmatprep.subr.bf16.mxu0 0
        %783 = vmatpush1.bf16.xpose.msra.mxu0 0
        %784 = vmatprep.subr.bf16.mxu0 0
        %785 = vmatpush1.bf16.xpose.msra.mxu0 0
        %786 = vmatprep.subr.bf16.mxu0 0
        %787 = vmatpush1.bf16.xpose.msra.mxu0 0
        %788 = vmatprep.subr.bf16.mxu0 0
        %789 = vmatpush1.bf16.xpose.msra.mxu0 0
        %790 = vmatprep.subr.bf16.mxu0 0
        %791 = vmatpush1.bf16.xpose.msra.mxu0 0
        %792 = vmatprep.subr.bf16.mxu0 0
        %793 = vmatpush1.bf16.xpose.msra.mxu0 0
        %794 = vmatprep.subr.bf16.mxu0 0
        %795 = vmatpush1.bf16.xpose.msra.mxu0 0
        %796 = vmatprep.subr.bf16.mxu0 0
        %797 = vmatpush1.bf16.xpose.msra.mxu0 0
        %798 = vmatprep.subr.bf16.mxu0 0
        %799 = vmatpush1.bf16.xpose.msra.mxu0 0
        %800 = vmatprep.subr.bf16.mxu0 0
        %801 = vmatpush1.bf16.xpose.msra.mxu0 0
        %802 = vmatprep.subr.bf16.mxu0 0
        %803 = vmatpush1.bf16.xpose.msra.mxu0 0
        %804 = vmatprep.subr.bf16.mxu0 0
        %805 = vmatpush1.bf16.xpose.msra.mxu0 0
        %806 = vmatprep.mubr.bf16.mxu0 0
        %807 = vmatmul.mubr.bf16.gmra.mrb[0].mxu0 %v769
        %v808 = vpop.f32.mrb[0].mxu0
        %v809 = vadd.f32 0.0, %v808
        %v810 = vpop.f32.mrb[0].mxu0
        %v811 = vpop.f32.mrb[0].mxu0
        %v812 = vpop.f32.mrb[0].mxu0
        %813 = vdwg.mxu0
        %v814 = vsel %vm431, %v809, -inf
        %815 = vmax.xlane.f32.xlu0 %v814
        %v816 = vpop.xlane.xlu0 %815
        %v817 = vsub.f32 %v809, %v816
        %v818 = vmul.f32 %v817, 1.442695
        %v819 = vpow.pop %v818
        %v820 = vsel %vm431, %v819, 0.0
        %821 = vadd.xlane.f32.xlu0 %v820
        %v822 = vpop.xlane.xlu0 %821
        %v823 = vrcp.pop %v822
        %v824 = vmul.f32 %v819, %v823
        %v825 = vpack.c.bf16 %v824, %v824
        %s826 = scalar_lea.vmem %s347, 24 [#allocation10]
        %827 = vst.msk [vmem:[%s826] sm:$0xff] %vm431, %v824
        %828 = vrot.lane.b32.xlu0 %v427, 40
        %v829 = vpop.permute.xlu0 %828
        %v831 = vsel %vm431, %v825, 0
        %v834 = vsel %vm496, %v829, 0
        %836 = vmatprep.subr.bf16.mxu0 0
        %837 = vmatpush1.bf16.msra.mxu0 %v834
        %838 = vmatprep.subr.bf16.mxu0 0
        %839 = vmatpush1.bf16.msra.mxu0 0
        %840 = vmatprep.subr.bf16.mxu0 0
        %841 = vmatpush1.bf16.msra.mxu0 0
        %842 = vmatprep.subr.bf16.mxu0 0
        %843 = vmatpush1.bf16.msra.mxu0 0
        %844 = vmatprep.subr.bf16.mxu0 0
        %845 = vmatpush1.bf16.msra.mxu0 0
        %846 = vmatprep.subr.bf16.mxu0 0
        %847 = vmatpush1.bf16.msra.mxu0 0
        %848 = vmatprep.subr.bf16.mxu0 0
        %849 = vmatpush1.bf16.msra.mxu0 0
        %850 = vmatprep.subr.bf16.mxu0 0
        %851 = vmatpush1.bf16.msra.mxu0 0
        %852 = vmatprep.subr.bf16.mxu0 0
        %853 = vmatpush1.bf16.msra.mxu0 0
        %854 = vmatprep.subr.bf16.mxu0 0
        %855 = vmatpush1.bf16.msra.mxu0 0
        %856 = vmatprep.subr.bf16.mxu0 0
        %857 = vmatpush1.bf16.msra.mxu0 0
        %858 = vmatprep.subr.bf16.mxu0 0
        %859 = vmatpush1.bf16.msra.mxu0 0
        %860 = vmatprep.subr.bf16.mxu0 0
        %861 = vmatpush1.bf16.msra.mxu0 0
        %862 = vmatprep.subr.bf16.mxu0 0
        %863 = vmatpush1.bf16.msra.mxu0 0
        %864 = vmatprep.subr.bf16.mxu0 0
        %865 = vmatpush1.bf16.msra.mxu0 0
        %866 = vmatprep.subr.bf16.mxu0 0
        %867 = vmatpush1.bf16.msra.mxu0 0
        %868 = vmatprep.mubr.bf16.mxu0 0
        %869 = vmatmul.mubr.bf16.gmra.mrb[0].mxu0 %v831
        %v870 = vpop.f32.mrb[0].mxu0
        %v871 = vadd.f32 0.0, %v870
        %v872 = vpop.f32.mrb[0].mxu0
        %v873 = vpop.f32.mrb[0].mxu0
        %v874 = vpop.f32.mrb[0].mxu0
        %875 = vdwg.mxu0
        %877 = vrot.lane.b32.xlu0 %v647, 8
        %v878 = vpop.permute.xlu0 %877
        %881 = vrot.lane.b32.xlu0 %v759, 16
        %v882 = vpop.permute.xlu0 %881
        %885 = vrot.lane.b32.xlu0 %v871, 24
        %v886 = vpop.permute.xlu0 %885
        %v888 = vsel %vm431, %v535, %v878
        %vm889 = vcmask 130048
        %v890 = vsel %vm889, %v888, %v882
        %vm891 = vcmask 195584
        %v892 = vsel %vm891, %v890, %v886
        %v893 = vpack.c.bf16 %v892, %v892
        %v894 = vld [vmem:[#allocation2] sm:$0xff]
        %v895 = vld [vmem:[#allocation8] sm:$0xf]
        %v896 = vld [vmem:[#allocation8 + $0x4] sm:$0xf]
        %v897 = vld [vmem:[#allocation8 + $0x8] sm:$0xf]
        %v898 = vld [vmem:[#allocation8 + $0xc] sm:$0xf]
        %v903 = vunpack.c.l.b16 %v895
        %v904 = vunpack.c.l.b16 %v896
        %v905 = vunpack.c.l.b16 %v897
        %v906 = vunpack.c.l.b16 %v898
        %v907 = vpack.c.b16 %v904, %v903
        %v908 = vpack.c.b16 %v906, %v905
        %v912 = vsel %vm383, %v893, 0
        %914 = vmatprep.subr.bf16.mxu0 0
        %915 = vmatpush1.bf16.msra.mxu0 %v907
        %916 = vmatprep.subr.bf16.mxu0 0
        %917 = vmatpush1.bf16.msra.mxu0 %v908
        %918 = vmatprep.subr.bf16.mxu0 0
        %919 = vmatpush1.bf16.msra.mxu0 0
        %920 = vmatprep.subr.bf16.mxu0 0
        %921 = vmatpush1.bf16.msra.mxu0 0
        %922 = vmatprep.subr.bf16.mxu0 0
        %923 = vmatpush1.bf16.msra.mxu0 0
        %924 = vmatprep.subr.bf16.mxu0 0
        %925 = vmatpush1.bf16.msra.mxu0 0
        %926 = vmatprep.subr.bf16.mxu0 0
        %927 = vmatpush1.bf16.msra.mxu0 0
        %928 = vmatprep.subr.bf16.mxu0 0
        %929 = vmatpush1.bf16.msra.mxu0 0
        %930 = vmatprep.subr.bf16.mxu0 0
        %931 = vmatpush1.bf16.msra.mxu0 0
        %932 = vmatprep.subr.bf16.mxu0 0
        %933 = vmatpush1.bf16.msra.mxu0 0
        %934 = vmatprep.subr.bf16.mxu0 0
        %935 = vmatpush1.bf16.msra.mxu0 0
        %936 = vmatprep.subr.bf16.mxu0 0
        %937 = vmatpush1.bf16.msra.mxu0 0
        %938 = vmatprep.subr.bf16.mxu0 0
        %939 = vmatpush1.bf16.msra.mxu0 0
        %940 = vmatprep.subr.bf16.mxu0 0
        %941 = vmatpush1.bf16.msra.mxu0 0
        %942 = vmatprep.subr.bf16.mxu0 0
        %943 = vmatpush1.bf16.msra.mxu0 0
        %944 = vmatprep.subr.bf16.mxu0 0
        %945 = vmatpush1.bf16.msra.mxu0 0
        %946 = vmatprep.mubr.bf16.mxu0 0
        %947 = vmatmul.mubr.bf16.gmra.mrb[0].mxu0 %v912
        %v948 = vpop.f32.mrb[0].mxu0
        %v949 = vadd.f32 0.0, %v948
        %v950 = vpop.f32.mrb[0].mxu0
        %v951 = vpop.f32.mrb[0].mxu0
        %v952 = vpop.f32.mrb[0].mxu0
        %953 = vdwg.mxu0
        %v954 = vadd.f32 %v894, %v949
        %955 = vst.msk [vmem:[#allocation2] sm:$0xff] %vm383, %v954
        // Predicated region
        $region57: #{tpu_custom_call.1} parent=39 // pred_check
          %p956 = pneg %p353
        $region58: #{tpu_custom_call.1} parent=39 // pred_check_branch
          %958 = sbr.rel (%p956) target = $region60
        $region59: #{tpu_custom_call.1} parent=39 // pred_region
          %v959 = vld [vmem:[#allocation2] sm:$0xff]
          %v960 = vld [vmem:[%s4] sm:$0x1]
          %v962 = vlaneseq
          %v963 = vshrl.u32 %v962, 7
          %v964 = vsub.s32 0, %v963
          %v965 = vrot.slane %v960, %v964
          %v967 = vadd.f32 %v959, %v965
          %968 = vst.msk [vmem:[%s340] sm:$0xff] %vm383, %v967
        $region60: #{tpu_custom_call.1} parent=39 // pred_fallthru
          _
        %s969 = sand.u32 %s173, 1
        %s970 = scalar_lea.sflag [#allocation5], %s969
        %s971 = sand.u32 %s173, 1
        %s972 = smul.addr %s971, 8
        %s973 = scalar_lea.vmem [#allocation9], %s972
        %s974 = sand.u32 %s201, 1
        %s975 = scalar_lea.sflag [#allocation11], %s974
        %s976 = sand.u32 %s201, 1
        %s977 = smul.addr %s976, 32
        %s978 = scalar_lea.vmem [#allocation10], %s977
        // Predicated region
        $region61: #{tpu_custom_call.1} parent=39 // pred_check
          %p979 = pneg %p183
        $region62: #{tpu_custom_call.1} parent=39 // pred_check_branch
          %981 = sbr.rel (%p979) target = $region64
        $region63: #{tpu_custom_call.1} parent=39 // pred_region
          %s983 = ssub.s32 128, 128
          %984 = vsyncadd %s970, %s983
          %s985 = smul.addr %s32, 128
          %s986 = scalar_lea.hbm %s5, %s985
          %s988 = sshll.u32 %s973, 4
          %s989 = int_to_ptr.vmem [resolvable:$true] %s988
          %991 = dma.vmem_to_hbm [thread:$0]  %s989, 128, %s986, %s970
        $region64: #{tpu_custom_call.1} parent=39 // pred_fallthru
          _
        // Predicated region
        $region65: #{tpu_custom_call.1} parent=39 // pred_check
          %p992 = pneg %p211
        $region66: #{tpu_custom_call.1} parent=39 // pred_check_branch
          %994 = sbr.rel (%p992) target = $region68
        $region67: #{tpu_custom_call.1} parent=39 // pred_region
          %s995 = smul.u32 4, %s33
          %s997 = ssub.s32 512, 512
          %998 = vsyncadd %s975, %s997
          %s999 = smul.addr %s32, 4
          %s1000 = sadd.s32 %s995, %s999
          %s1001 = smul.addr %s1000, 128
          %s1002 = scalar_lea.hbm %s6, %s1001
          %s1003 = sshll.u32 %s978, 4
          %s1004 = int_to_ptr.vmem [resolvable:$true] %s1003
          %1009 = dma.vmem_to_hbm [thread:$0]  %s1004, 512, %s1002, %s975, 128, 128, 8
        $region68: #{tpu_custom_call.1} parent=39 // pred_fallthru
          _
      $region40: #{tpu_custom_call.1} parent=5 // pred_fallthru
        _
      %p1010 = scmp.le.s32.totalorder 2, %s23
      // Predicated region
      $region69: #{tpu_custom_call.1} parent=5 // pred_check
        %p1011 = pneg %p1010
      $region70: #{tpu_custom_call.1} parent=5 // pred_check_branch
        %1013 = sbr.rel (%p1011) target = $region72
      $region71: #{tpu_custom_call.1} parent=5 // pred_region
        %s1014 = ssub.s32 %s23, 2
        // Predicated region
        $region73: #{tpu_custom_call.1} parent=71 // pred_check
          %p1015 = pneg %p189
        $region74: #{tpu_custom_call.1} parent=71 // pred_check_branch
          %1017 = sbr.rel (%p1015) target = $region76
        $region75: #{tpu_custom_call.1} parent=71 // pred_region
          %s1018 = sand.u32 %s174, 1
          %s1019 = scalar_lea.sflag [#allocation5], %s1018
          %s1020 = sand.u32 %s174, 1
          %s1021 = smul.addr %s1020, 8
          %s1022 = scalar_lea.vmem [#allocation9], %s1021
          %1023 = dma.done %s1019, 128
        $region76: #{tpu_custom_call.1} parent=71 // pred_fallthru
          _
        // Predicated region
        $region77: #{tpu_custom_call.1} parent=71 // pred_check
          %p1024 = pneg %p217
        $region78: #{tpu_custom_call.1} parent=71 // pred_check_branch
          %1026 = sbr.rel (%p1024) target = $region80
        $region79: #{tpu_custom_call.1} parent=71 // pred_region
          %s1027 = sand.u32 %s202, 1
          %s1028 = scalar_lea.sflag [#allocation11], %s1027
          %s1029 = sand.u32 %s202, 1
          %s1030 = smul.addr %s1029, 32
          %s1031 = scalar_lea.vmem [#allocation10], %s1030
          %1032 = dma.done %s1028, 512
        $region80: #{tpu_custom_call.1} parent=71 // pred_fallthru
          _
      $region72: #{tpu_custom_call.1} parent=5 // pred_fallthru
        _
    $region6: #{tpu_custom_call.1} parent=1 // loop_footer
      %s27 = sadd.s32 1, %s23
    $region7: #{tpu_custom_call.1} parent=1 // loop_footer_branch
      %22 = sbr.rel target = $region3
    $region8: #{tpu_custom_call.1} parent=1 // loop_exit
      _
    %1033 = vsyncpa [#allocation4], 1
    %s1034 = scalar_lea.sflag [#allocation4], 1
    %1035 = vsyncpa %s1034, 1
    %1036 = vsyncpa [#allocation7], 1
    %1037 = vsyncpa [#allocation5], 1
    %s1038 = scalar_lea.sflag [#allocation5], 1
    %1039 = vsyncpa %s1038, 1
    %1040 = vsyncpa [#allocation11], 1
    %s1041 = scalar_lea.sflag [#allocation11], 1
    %1042 = vsyncpa %s1041, 1

</llo_original>
